<compile_context>
chip_gen: v7x
topology: tpu7x:2x2x1
jax: 0.10.0
libtpu: 0.0.40
codegen_flags: <defaults>
</compile_context>

<pallas_src>
import jax
import jax.numpy as jnp
from jax.experimental import pallas as pl
from jax.experimental.pallas import tpu as pltpu


def _threshold_kernel(thresh_ref, x_ref, o_ref):
    # thresh_ref: (1,) scalar in SMEM (scalar prefetch). Its dtype is the compare dtype.
    t = thresh_ref[0]
    o_ref[...] = (x_ref[...].astype(thresh_ref.dtype) >= t).astype(o_ref.dtype)


def _round_up(v, m):
    return -(-v // m) * m


def _sublane_multiple(itemsize):
    # Native TPU tile second-minor extent: 8 (32-bit), 16 (16-bit), 32 (8-bit).
    return max(8, 32 // max(1, itemsize))


def _plan_layout(n, last_dim, bytes_per_elem):
    """Pick a (rows, lanes, needs_pad) 2-D view of the flattened data.

    Prefers a wide lane-dense slab with no padding; otherwise keeps the array's native
    trailing dim as the lane axis (never needs padding); pads <= lanes-1 elements only
    in pathological cases.
    """
    for lanes in (1024, 512, 256, 128):
        if n % lanes == 0:
            return n // lanes, lanes, False
    if last_dim > 0 and n % last_dim == 0 and last_dim * bytes_per_elem <= (1 << 19):
        return n // last_dim, last_dim, False
    lanes = 128
    return -(-n // lanes), lanes, True


def threshold(x, threshold_val=128, *, out_dtype=jnp.int32, block_bytes=8 << 20):
    """Pallas equivalent of Threshold.forward: (x >= threshold) as an int mask."""
    x = jnp.asarray(x)
    out_dtype = jnp.dtype(out_dtype)
    orig_shape = x.shape

    # Degenerate cases: nothing worth streaming through a kernel.
    if x.ndim == 0 or x.size == 0:
        return (x >= threshold_val).astype(out_dtype)

    in_itemsize = x.dtype.itemsize
    out_itemsize = out_dtype.itemsize

    # Exact integer compare when possible; otherwise compare in f32.
    # TODO(synk): f32 compare is lossy for integer |x| >= 2^24 with a fractional threshold.
    try:
        is_integral_thresh = float(threshold_val) == float(int(threshold_val))
    except (TypeError, ValueError):
        is_integral_thresh = False
    if jnp.issubdtype(x.dtype, jnp.integer) and is_integral_thresh:
        thresh_arr = jnp.asarray([int(threshold_val)], dtype=jnp.int32)
    else:
        thresh_arr = jnp.asarray([threshold_val], dtype=jnp.float32)

    n = x.size
    rows, lanes, needs_pad = _plan_layout(n, orig_shape[-1], in_itemsize + out_itemsize)

    flat = x.reshape(-1)
    if needs_pad:
        # Rare fallback only (e.g. prime-length 1-D); pads at most lanes-1 elements.
        flat = jnp.pad(flat, (0, rows * lanes - n))
    x2d = flat.reshape(rows, lanes)

    sub = max(_sublane_multiple(in_itemsize), _sublane_multiple(out_itemsize))
    if rows <= sub:
        block_rows = rows  # full second-minor dim -> always a legal tile
    else:
        # ~block_bytes of (in + out) per grid step amortizes per-step overhead;
        # cap at ceil(rows/2) so the parallel grid has >= 2 steps (v7x megacore).
        desired = max(sub, (block_bytes // ((in_itemsize + out_itemsize) * lanes)) // sub * sub)
        half = _round_up(-(-rows // 2), sub)
        block_rows = max(sub, min(desired, half))
    grid = (pl.cdiv(rows, block_rows),)

    out2d = pl.pallas_call(
        _threshold_kernel,
        out_shape=jax.ShapeDtypeStruct((rows, lanes), out_dtype),
        grid_spec=pltpu.PrefetchScalarGridSpec(
            num_scalar_prefetch=1,
            grid=grid,
            in_specs=[pl.BlockSpec((block_rows, lanes), lambda i, t: (i, 0))],
            out_specs=pl.BlockSpec((block_rows, lanes), lambda i, t: (i, 0)),
        ),
        compiler_params=pltpu.CompilerParams(
            dimension_semantics=("parallel",),
            vmem_limit_bytes=32 * 1024 * 1024,
        ),
    )(thresh_arr, x2d)

    if needs_pad:
        return out2d.reshape(-1)[:n].reshape(orig_shape)
    return out2d.reshape(orig_shape)


if __name__ == "__main__":
    key = jax.random.PRNGKey(0)
    # Small NCHW image batch, values in [0, 255] like 8-bit image data.
    x = jax.random.uniform(key, (2, 4, 16, 16), dtype=jnp.float32, minval=0.0, maxval=255.0)
    out = jax.block_until_ready(threshold(x, threshold_val=128))
    ref = (x >= 128).astype(jnp.int32)
    assert out.shape == ref.shape and out.dtype == ref.dtype
    assert bool(jnp.all(out == ref))

    # Unaligned total size: exercises the no-pad trailing-dim path (zero extra HBM passes).
    x2 = jax.random.uniform(jax.random.PRNGKey(1), (3, 5, 7), dtype=jnp.float32,
                            minval=0.0, maxval=255.0)
    out2 = jax.block_until_ready(threshold(x2, threshold_val=64))
    assert bool(jnp.all(out2 == (x2 >= 64).astype(jnp.int32)))

    # Native-dtype image data (uint8) stays narrow all the way to the compare.
    x3 = jax.random.randint(jax.random.PRNGKey(2), (2, 4, 32, 32), 0, 256,
                            dtype=jnp.int32).astype(jnp.uint8)
    out3 = jax.block_until_ready(threshold(x3, threshold_val=128))
    assert bool(jnp.all(out3 == (x3 >= 128).astype(jnp.int32)))

    print("KERNEL_OK")
</pallas_src>

<mosaic_0001>
module attributes {stable_mosaic.version = 11 : i64} {
  func.func @_threshold_kernel(%arg0: i32, %arg1: memref<1xf32, #tpu.memory_space<smem>>, %arg2: memref<2x1024xf32, #tpu.memory_space<vmem>>, %arg3: memref<2x1024xi32, #tpu.memory_space<vmem>>) attributes {dimension_semantics = [#tpu.dimension_semantics<parallel>], iteration_bounds = array<i64: 1>, scalar_prefetch = 1 : i64, scratch_operands = 0 : i64, tpu.core_type = #tpu.core_type<tc>, window_params = [{transform_indices = @transform_0, window_bounds = array<i64: 2, 1024>}, {transform_indices = @transform_1, window_bounds = array<i64: 2, 1024>}]} {
    %c0 = arith.constant 0 : index
    %0 = memref.load %arg1[%c0] : memref<1xf32, #tpu.memory_space<smem>>
    %c0_0 = arith.constant 0 : index
    %c0_1 = arith.constant 0 : index
    %1 = vector.load %arg2[%c0_0, %c0_1] : memref<2x1024xf32, #tpu.memory_space<vmem>>, vector<2x1024xf32>
    %2 = vector.broadcast %0 : f32 to vector<2x1024xf32>
    %3 = arith.cmpf oge, %1, %2 : vector<2x1024xf32>
    %4 = arith.extui %3 : vector<2x1024xi1> to vector<2x1024xi32>
    %c0_2 = arith.constant 0 : index
    %c0_3 = arith.constant 0 : index
    %5 = vector.load %arg3[%c0_2, %c0_3] : memref<2x1024xi32, #tpu.memory_space<vmem>>, vector<2x1024xi32>
    tpu.vector_store %arg3[%c0_2, %c0_3], %4 {strides = array<i32>} : memref<2x1024xi32, #tpu.memory_space<vmem>>, vector<2x1024xi32>,
    return
  }
  func.func @transform_0(%arg0: i32, %arg1: memref<1xf32, #tpu.memory_space<smem>>) -> (i32, i32) {
    %c0_i32 = arith.constant 0 : i32
    %c0_i32_0 = arith.constant 0 : i32
    return %arg0, %c0_i32 : i32, i32
  }
  func.func @transform_1(%arg0: i32, %arg1: memref<1xf32, #tpu.memory_space<smem>>) -> (i32, i32) {
    %c0_i32 = arith.constant 0 : i32
    %c0_i32_0 = arith.constant 0 : i32
    return %arg0, %c0_i32 : i32, i32
  }
}

</mosaic_0001>

<llo_original>
// kernel: tpu_custom_call.1
$region0: #{tpu_custom_call.1}
  #allocation0 [shape = 'u32[]', space=smem, size = 0x4, offset = 0x4, fixed_abs, tag = 'smem constant byte address 0x4 - core index']
  #allocation1 [shape = 'u32[144,128]{1,0:T(1,128)}', space=vmem, size = 0x12000, scoped, tag = 'internal scratch']
  #allocation2 [shape = 's32[1]{0}', space=sflag, size = 0x4, scoped, tag = 'scoped memory for tpu_custom_call.1']
  #allocation3 [shape = 'f32[1]{0:T(128)S(6)}', space=smem, size = 0x200, scoped, tag = 'prefetched SMEM operand 0']
  %s0 = inlined_call_operand.<no memory space> [shape: f32[1], index: 0, kind: input, shape index: {}]
  %s1 = inlined_call_operand.hbm [shape: f32[2,1024], index: 1, kind: input, shape index: {}]
  %s2 = inlined_call_operand.hbm [shape: s32[2,1024], index: 2, kind: output, shape index: {}]
  %s3 = sld [smem:[#allocation0]]
  $region18: #{tpu_custom_call.1} parent=0
    _
  %s5 = ssub.s32 1, %s3
  %s6 = scalar_select 0, %s5, %s3
  %7 = sst [smem:[#allocation3]] %s0
  $region1: #{tpu_custom_call.1} parent=0
    #allocation4 [shape = 'u8[8192]{0}', space=vmem, size = 0x2000, scoped, tag = 'input window, operand 1, single buffered']
    #allocation5 [shape = 's32[1]{0}', space=sflag, size = 0x4, scoped, tag = 'scoped memory for tpu_custom_call.1']
    #allocation6 [shape = 's32[1]{0}', space=sflag, size = 0x4, scoped, tag = 'scoped memory for tpu_custom_call.1']
    #allocation7 [shape = 'u8[8192]{0}', space=vmem, size = 0x2000, scoped, tag = 'output window, operand 0, single buffered']
    %8 = vsyncpa [#allocation5], 0
    %9 = vsyncpa [#allocation6], 0
    // Predicated region
    $region2: #{tpu_custom_call.1} parent=1 // pred_check
      _
    $region3: #{tpu_custom_call.1} parent=1 // pred_check_branch
      %11 = sbr.rel (0) target = $region5
    $region4: #{tpu_custom_call.1} parent=1 // pred_region
      %s13 = ssub.s32 256, 256
      %14 = vsyncadd [#allocation5], %s13
      %s16 = sshll.u32 [#allocation4], 4
      %s17 = int_to_ptr.vmem [resolvable:$true] %s16
      %19 = dma.hbm_to_vmem [thread:$0]  %s1, 256, %s17, [#allocation5]
    $region5: #{tpu_custom_call.1} parent=1 // pred_fallthru
      _
    // Predicated region
    $region6: #{tpu_custom_call.1} parent=1 // pred_check
      _
    $region7: #{tpu_custom_call.1} parent=1 // pred_check_branch
      %21 = sbr.rel (0) target = $region9
    $region8: #{tpu_custom_call.1} parent=1 // pred_region
      %22 = dma.done [#allocation5], 256
    $region9: #{tpu_custom_call.1} parent=1 // pred_fallthru
      _
    %s23 = sld [smem:[#allocation3]]
    %v24 = vld [vmem:[#allocation4] sm:$0xff]
    %v25 = vld [vmem:[#allocation4 + $0x8] sm:$0xff]
    %v26 = vstv %s23
    %vm27 = vcmp.ge.f32.partialorder %v24, %v26
    %vm28 = vcmp.ge.f32.partialorder %v25, %v26
    %v29 = vsel %vm27, 1, 0
    %v30 = vsel %vm28, 1, 0
    %31 = vst [vmem:[#allocation7] sm:$0xff] %v29
    %32 = vst [vmem:[#allocation7 + $0x8] sm:$0xff] %v30
    // Predicated region
    $region10: #{tpu_custom_call.1} parent=1 // pred_check
      _
    $region11: #{tpu_custom_call.1} parent=1 // pred_check_branch
      %34 = sbr.rel (0) target = $region13
    $region12: #{tpu_custom_call.1} parent=1 // pred_region
      %s36 = ssub.s32 256, 256
      %37 = vsyncadd [#allocation6], %s36
      %s39 = sshll.u32 [#allocation7], 4
      %s40 = int_to_ptr.vmem [resolvable:$true] %s39
      %42 = dma.vmem_to_hbm [thread:$0]  %s40, 256, %s2, [#allocation6]
    $region13: #{tpu_custom_call.1} parent=1 // pred_fallthru
      _
    // Predicated region
    $region14: #{tpu_custom_call.1} parent=1 // pred_check
      _
    $region15: #{tpu_custom_call.1} parent=1 // pred_check_branch
      %44 = sbr.rel (0) target = $region17
    $region16: #{tpu_custom_call.1} parent=1 // pred_region
      %45 = dma.done [#allocation6], 256
    $region17: #{tpu_custom_call.1} parent=1 // pred_fallthru
      _
    %46 = vsyncpa [#allocation5], 1
    %47 = vsyncpa [#allocation6], 1

</llo_original>
